<compile_context>
chip_gen: v7x
topology: tpu7x:2x2x1
jax: 0.10.0
libtpu: 0.0.40
codegen_flags: <defaults>
</compile_context>

<pallas_src>
import functools

import jax
import jax.numpy as jnp
from jax.experimental import pallas as pl
from jax.experimental.pallas import tpu as pltpu

_EPS = 1e-8  # F.cosine_similarity default eps


def _round_up(x, m):
    return (x + m - 1) // m * m


# ------------------------------- kernel ------------------------------------
def _cosine_loss_kernel(p_ref, t_ref, o_ref, *, n_rows, tile_n, tiles_per_slice):
    c = pl.program_id(0)   # slice (core) axis, "parallel"
    i = pl.program_id(1)   # tile axis within the slice, "arbitrary"

    # Zero the per-slice accumulator block at the start of each slice's sweep.
    @pl.when(i == 0)
    def _():
        o_ref[...] = jnp.zeros_like(o_ref)

    p = p_ref[...].astype(jnp.float32)             # (tile_n, C)
    t = t_ref[...].astype(jnp.float32)             # (tile_n, C)

    dot = jnp.sum(p * t, axis=-1, keepdims=True)   # (tile_n, 1)
    pp = jnp.sum(p * p, axis=-1, keepdims=True)    # (tile_n, 1)
    tt = jnp.sum(t * t, axis=-1, keepdims=True)    # (tile_n, 1)

    # cos = dot / max(||p||*||t||, eps) == dot * rsqrt(max(pp*tt, eps^2))
    inv = jax.lax.rsqrt(jnp.maximum(pp * tt, jnp.float32(_EPS * _EPS)))
    cos = dot * inv                                # (tile_n, 1)

    # Mask rows that fall past the true row count (ragged last tile and the
    # clamped phantom step of a shorter slice contribute exactly zero).
    row0 = (c * tiles_per_slice + i) * tile_n
    rid = jax.lax.broadcasted_iota(jnp.int32, cos.shape, 0) + row0
    cos = jnp.where(rid < n_rows, cos, jnp.float32(0.0))

    # Accumulate this tile's cosine sum into every element of the (8,128)
    # output block (scalar broadcast add); the wrapper reads element [0,0].
    o_ref[...] = o_ref[...] + jnp.sum(cos)


# ------------------------------- wrapper ------------------------------------
def latent_causal_reconstruction_loss(predictions, targets):
    """1 - mean cosine similarity along the last axis, as one fused kernel."""
    assert predictions.shape == targets.shape, "shape mismatch"
    assert predictions.dtype == targets.dtype, "dtype mismatch"

    feat = predictions.shape[-1]
    n_rows = predictions.size // feat
    itemsize = jnp.dtype(predictions.dtype).itemsize
    pack = {4: 8, 2: 16, 1: 32}.get(itemsize, 8)   # sublane packing per dtype

    # Fold all leading (batch/seq) dims into the row (sublane) axis; the
    # feature dim stays on the lane axis. No dtype upcast here (HBM bytes!).
    p2 = predictions.reshape(n_rows, feat)
    t2 = targets.reshape(n_rows, feat)

    # Tile size: ~1 MiB per operand per pipeline buffer, capped at 2048 rows,
    # rounded to sublane packing, never larger than the (padded) problem.
    row_bytes = feat * itemsize
    tile_n = max(pack, (1 << 20) // max(row_bytes, 1))
    tile_n = min(tile_n, 2048)
    tile_n = (tile_n // pack) * pack
    tile_n = min(tile_n, _round_up(n_rows, pack))

    tiles_total = (n_rows + tile_n - 1) // tile_n
    num_slices = 2 if tiles_total >= 2 else 1      # v7x: one slice per TC
    tiles_per_slice = (tiles_total + num_slices - 1) // num_slices

    def in_map(c, i):
        blk = c * tiles_per_slice + i
        # Clamp the phantom step of a shorter slice to a valid tile; its
        # contribution is masked to zero inside the kernel.
        return (jnp.minimum(blk, tiles_total - 1), 0)

    tile_bytes = tile_n * feat * itemsize
    vmem_limit = int(min(64 << 20, max(16 << 20, 4 * tile_bytes + (2 << 20))))

    kernel = functools.partial(
        _cosine_loss_kernel,
        n_rows=n_rows, tile_n=tile_n, tiles_per_slice=tiles_per_slice)

    out = pl.pallas_call(
        kernel,
        grid=(num_slices, tiles_per_slice),
        in_specs=[
            pl.BlockSpec((tile_n, feat), in_map),
            pl.BlockSpec((tile_n, feat), in_map),
        ],
        out_specs=pl.BlockSpec((8, 128), lambda c, i: (c, 0)),
        out_shape=jax.ShapeDtypeStruct((8 * num_slices, 128), jnp.float32),
        compiler_params=pltpu.CompilerParams(
            dimension_semantics=("parallel", "arbitrary"),
            vmem_limit_bytes=vmem_limit),
        cost_estimate=pl.CostEstimate(
            flops=6 * n_rows * feat,
            transcendentals=n_rows,
            bytes_accessed=2 * n_rows * feat * itemsize),
    )(p2, t2)

    # One representative element per slice block; finish 1 - sum/N on host XLA.
    partial_sums = out[0::8, 0]                    # (num_slices,)
    return jnp.float32(1.0) - jnp.sum(partial_sums) / jnp.float32(n_rows)


# --------------------------- pure-JAX reference -----------------------------
def latent_causal_reconstruction_loss_ref(predictions, targets):
    p = predictions.astype(jnp.float32)
    t = targets.astype(jnp.float32)
    dot = jnp.sum(p * t, axis=-1)
    n1 = jnp.sqrt(jnp.sum(p * p, axis=-1))
    n2 = jnp.sqrt(jnp.sum(t * t, axis=-1))
    cos = dot / jnp.maximum(n1 * n2, _EPS)
    return 1.0 - jnp.mean(cos)


# --------------------------------- main --------------------------------------
if __name__ == "__main__":
    key = jax.random.PRNGKey(0)
    k1, k2 = jax.random.split(key, 2)

    Bsz, Tseq, Cdim = 2, 16, 128   # batch, sequence, latent dim (lane-dense)
    predictions = jax.random.normal(k1, (Bsz, Tseq, Cdim), dtype=jnp.float32)
    # correlated targets so the cosine similarity is non-trivial
    targets = predictions + 0.5 * jax.random.normal(
        k2, (Bsz, Tseq, Cdim), dtype=jnp.float32)

    # float32 path
    loss = jax.block_until_ready(
        latent_causal_reconstruction_loss(predictions, targets))
    ref = latent_causal_reconstruction_loss_ref(predictions, targets)
    assert jnp.allclose(loss, ref, rtol=1e-4, atol=1e-5), (
        f"f32 mismatch: kernel={loss} ref={ref}")

    # bf16 pass-through path (halves HBM bytes; f32 accumulation in-kernel)
    pred_bf = predictions.astype(jnp.bfloat16)
    targ_bf = targets.astype(jnp.bfloat16)
    loss_bf = jax.block_until_ready(
        latent_causal_reconstruction_loss(pred_bf, targ_bf))
    ref_bf = latent_causal_reconstruction_loss_ref(pred_bf, targ_bf)
    assert jnp.allclose(loss_bf, ref_bf, rtol=1e-4, atol=1e-4), (
        f"bf16 mismatch: kernel={loss_bf} ref={ref_bf}")

    print("KERNEL_OK")
</pallas_src>

<mosaic_0001>
module attributes {stable_mosaic.version = 11 : i64} {
  func.func @_cosine_loss_kernel(%arg0: i32, %arg1: i32, %arg2: memref<32x128xf32, #tpu.memory_space<vmem>>, %arg3: memref<32x128xf32, #tpu.memory_space<vmem>>, %arg4: memref<8x128xf32, #tpu.memory_space<vmem>>) attributes {dimension_semantics = [#tpu.dimension_semantics<parallel>, #tpu.dimension_semantics<arbitrary>], iteration_bounds = array<i64: 1, 1>, scalar_prefetch = 0 : i64, scratch_operands = 0 : i64, tpu.core_type = #tpu.core_type<tc>, window_params = [{transform_indices = @transform_0, window_bounds = array<i64: 32, 128>}, {transform_indices = @transform_1, window_bounds = array<i64: 32, 128>}, {transform_indices = @transform_2, window_bounds = array<i64: 8, 128>}]} {
    %c0_i32 = arith.constant 0 : i32
    %0 = arith.cmpi eq, %arg1, %c0_i32 : i32
    %1 = arith.extui %0 : i1 to i32
    %c0_i32_0 = arith.constant 0 : i32
    %2 = arith.cmpi ne, %1, %c0_i32_0 : i32
    scf.if %2 {
      %cst_14 = arith.constant 0.000000e+00 : f32
      %37 = vector.broadcast %cst_14 : f32 to vector<8x128xf32>
      %c0_15 = arith.constant 0 : index
      %c0_16 = arith.constant 0 : index
      %38 = vector.load %arg4[%c0_15, %c0_16] : memref<8x128xf32, #tpu.memory_space<vmem>>, vector<8x128xf32>
      tpu.vector_store %arg4[%c0_15, %c0_16], %37 {strides = array<i32>} : memref<8x128xf32, #tpu.memory_space<vmem>>, vector<8x128xf32>,
    } else {
    }
    %c0 = arith.constant 0 : index
    %c0_1 = arith.constant 0 : index
    %3 = vector.load %arg2[%c0, %c0_1] : memref<32x128xf32, #tpu.memory_space<vmem>>, vector<32x128xf32>
    %c0_2 = arith.constant 0 : index
    %c0_3 = arith.constant 0 : index
    %4 = vector.load %arg3[%c0_2, %c0_3] : memref<32x128xf32, #tpu.memory_space<vmem>>, vector<32x128xf32>
    %5 = arith.mulf %3, %4 : vector<32x128xf32>
    %cst = arith.constant dense<0.000000e+00> : vector<32xf32>
    %6 = vector.multi_reduction <add>, %5, %cst [1] : vector<32x128xf32> to vector<32xf32>
    %7 = vector.shape_cast %6 : vector<32xf32> to vector<32x1xf32>
    %8 = arith.mulf %3, %3 : vector<32x128xf32>
    %cst_4 = arith.constant dense<0.000000e+00> : vector<32xf32>
    %9 = vector.multi_reduction <add>, %8, %cst_4 [1] : vector<32x128xf32> to vector<32xf32>
    %10 = vector.shape_cast %9 : vector<32xf32> to vector<32x1xf32>
    %11 = arith.mulf %4, %4 : vector<32x128xf32>
    %cst_5 = arith.constant dense<0.000000e+00> : vector<32xf32>
    %12 = vector.multi_reduction <add>, %11, %cst_5 [1] : vector<32x128xf32> to vector<32xf32>
    %13 = vector.shape_cast %12 : vector<32xf32> to vector<32x1xf32>
    %14 = arith.mulf %10, %13 : vector<32x1xf32>
    %cst_6 = arith.constant 1.000000e-16 : f32
    %15 = vector.broadcast %cst_6 : f32 to vector<32x1xf32>
    %16 = arith.maximumf %14, %15 : vector<32x1xf32>
    %17 = math.rsqrt %16 : vector<32x1xf32>
    %18 = arith.mulf %7, %17 : vector<32x1xf32>
    %c1_i32 = arith.constant 1 : i32
    %19 = arith.muli %arg0, %c1_i32 : i32
    %20 = arith.addi %19, %arg1 : i32
    %c32_i32 = arith.constant 32 : i32
    %21 = arith.muli %20, %c32_i32 : i32
    %22 = tpu.iota {dimensions = array<i32: 0>} : vector<32x1xi32>
    %23 = vector.broadcast %21 : i32 to vector<32x1xi32>
    %24 = arith.addi %22, %23 : vector<32x1xi32>
    %c32_i32_7 = arith.constant 32 : i32
    %25 = vector.broadcast %c32_i32_7 : i32 to vector<32x1xi32>
    %26 = arith.cmpi slt, %24, %25 : vector<32x1xi32>
    %cst_8 = arith.constant 0.000000e+00 : f32
    %27 = vector.broadcast %cst_8 : f32 to vector<32x1xf32>
    %28 = arith.select %26, %18, %27 : vector<32x1xi1>, vector<32x1xf32>
    %c0_9 = arith.constant 0 : index
    %c0_10 = arith.constant 0 : index
    %29 = vector.load %arg4[%c0_9, %c0_10] : memref<8x128xf32, #tpu.memory_space<vmem>>, vector<8x128xf32>
    %30 = vector.shape_cast %28 : vector<32x1xf32> to vector<1x32x1xf32>
    %cst_11 = arith.constant dense<0.000000e+00> : vector<1xf32>
    %31 = vector.multi_reduction <add>, %30, %cst_11 [1, 2] : vector<1x32x1xf32> to vector<1xf32>
    %32 = vector.shape_cast %31 : vector<1xf32> to vector<1x1x1xf32>
    %33 = vector.extract %32[0, 0, 0] : f32 from vector<1x1x1xf32>
    %34 = vector.broadcast %33 : f32 to vector<8x128xf32>
    %35 = arith.addf %29, %34 : vector<8x128xf32>
    %c0_12 = arith.constant 0 : index
    %c0_13 = arith.constant 0 : index
    %36 = vector.load %arg4[%c0_12, %c0_13] : memref<8x128xf32, #tpu.memory_space<vmem>>, vector<8x128xf32>
    tpu.vector_store %arg4[%c0_12, %c0_13], %35 {strides = array<i32>} : memref<8x128xf32, #tpu.memory_space<vmem>>, vector<8x128xf32>,
    return
  }
  func.func @transform_0(%arg0: i32, %arg1: i32) -> (i32, i32) {
    %c1_i32 = arith.constant 1 : i32
    %0 = arith.muli %arg0, %c1_i32 : i32
    %1 = arith.addi %0, %arg1 : i32
    %c0_i32 = arith.constant 0 : i32
    %2 = arith.minsi %1, %c0_i32 : i32
    %c0_i32_0 = arith.constant 0 : i32
    %c0_i32_1 = arith.constant 0 : i32
    return %2, %c0_i32_0 : i32, i32
  }
  func.func @transform_1(%arg0: i32, %arg1: i32) -> (i32, i32) {
    %c1_i32 = arith.constant 1 : i32
    %0 = arith.muli %arg0, %c1_i32 : i32
    %1 = arith.addi %0, %arg1 : i32
    %c0_i32 = arith.constant 0 : i32
    %2 = arith.minsi %1, %c0_i32 : i32
    %c0_i32_0 = arith.constant 0 : i32
    %c0_i32_1 = arith.constant 0 : i32
    return %2, %c0_i32_0 : i32, i32
  }
  func.func @transform_2(%arg0: i32, %arg1: i32) -> (i32, i32) {
    %c0_i32 = arith.constant 0 : i32
    %c0_i32_0 = arith.constant 0 : i32
    return %arg0, %c0_i32 : i32, i32
  }
}

</mosaic_0001>

<llo_original>
// kernel: tpu_custom_call.1
$region0: #{tpu_custom_call.1}
  #allocation0 [shape = 'u32[]', space=smem, size = 0x4, offset = 0x4, fixed_abs, tag = 'smem constant byte address 0x4 - core index']
  #allocation1 [shape = 'u32[144,128]{1,0:T(1,128)}', space=vmem, size = 0x12000, scoped, tag = 'internal scratch']
  %s0 = inlined_call_operand.hbm [shape: f32[32,128], index: 0, kind: input, shape index: {}]
  %s1 = inlined_call_operand.hbm [shape: f32[32,128], index: 1, kind: input, shape index: {}]
  %s2 = inlined_call_operand.hbm [shape: f32[8,128], index: 2, kind: output, shape index: {}]
  %s3 = sld [smem:[#allocation0]]
  $region30: #{tpu_custom_call.1} parent=0
    _
  %s5 = ssub.s32 1, %s3
  %s6 = scalar_select 0, %s5, %s3
  $region1: #{tpu_custom_call.1} parent=0
    #allocation2 [shape = 'u8[16384]{0}', space=vmem, size = 0x4000, scoped, tag = 'input window, operand 0, single buffered']
    #allocation3 [shape = 's32[1]{0}', space=sflag, size = 0x4, scoped, tag = 'scoped memory for tpu_custom_call.1']
    #allocation4 [shape = 's32[1]{0}', space=sflag, size = 0x4, scoped, tag = 'scoped memory for tpu_custom_call.1']
    #allocation5 [shape = 'u8[16384]{0}', space=vmem, size = 0x4000, scoped, tag = 'input window, operand 1, single buffered']
    #allocation6 [shape = 's32[1]{0}', space=sflag, size = 0x4, scoped, tag = 'scoped memory for tpu_custom_call.1']
    #allocation7 [shape = 'u8[4096]{0}', space=vmem, size = 0x1000, scoped, tag = 'output window, operand 0, single buffered']
    %7 = vsyncpa [#allocation3], 0
    %8 = vsyncpa [#allocation6], 0
    %9 = vsyncpa [#allocation4], 0
    // Predicated region
    $region2: #{tpu_custom_call.1} parent=1 // pred_check
      _
    $region3: #{tpu_custom_call.1} parent=1 // pred_check_branch
      %11 = sbr.rel (0) target = $region5
    $region4: #{tpu_custom_call.1} parent=1 // pred_region
      %s12 = sadd.s32 0, 0
      %p13 = scmp.lt.s32.totalorder %s12, 0
      %s14 = scalar_select %p13, %s12, 0
      %s15 = smul.u32 4, %s14
      %s17 = ssub.s32 512, 512
      %18 = vsyncadd [#allocation3], %s17
      %s19 = smul.addr %s15, 128
      %s20 = scalar_lea.hbm %s0, %s19
      %s21 = sshll.u32 [#allocation2], 4
      %s22 = int_to_ptr.vmem [resolvable:$true] %s21
      %27 = dma.hbm_to_vmem [thread:$0]  %s20, 512, %s22, [#allocation3], 128, 128, 8
    $region5: #{tpu_custom_call.1} parent=1 // pred_fallthru
      _
    // Predicated region
    $region6: #{tpu_custom_call.1} parent=1 // pred_check
      _
    $region7: #{tpu_custom_call.1} parent=1 // pred_check_branch
      %29 = sbr.rel (0) target = $region9
    $region8: #{tpu_custom_call.1} parent=1 // pred_region
      %s30 = sadd.s32 0, 0
      %p31 = scmp.lt.s32.totalorder %s30, 0
      %s32 = scalar_select %p31, %s30, 0
      %s33 = smul.u32 4, %s32
      %s35 = ssub.s32 512, 512
      %36 = vsyncadd [#allocation6], %s35
      %s37 = smul.addr %s33, 128
      %s38 = scalar_lea.hbm %s1, %s37
      %s39 = sshll.u32 [#allocation5], 4
      %s40 = int_to_ptr.vmem [resolvable:$true] %s39
      %45 = dma.hbm_to_vmem [thread:$0]  %s38, 512, %s40, [#allocation6], 128, 128, 8
    $region9: #{tpu_custom_call.1} parent=1 // pred_fallthru
      _
    // Predicated region
    $region10: #{tpu_custom_call.1} parent=1 // pred_check
      _
    $region11: #{tpu_custom_call.1} parent=1 // pred_check_branch
      %47 = sbr.rel (0) target = $region13
    $region12: #{tpu_custom_call.1} parent=1 // pred_region
      %48 = dma.done [#allocation3], 512
    $region13: #{tpu_custom_call.1} parent=1 // pred_fallthru
      _
    // Predicated region
    $region14: #{tpu_custom_call.1} parent=1 // pred_check
      _
    $region15: #{tpu_custom_call.1} parent=1 // pred_check_branch
      %50 = sbr.rel (0) target = $region17
    $region16: #{tpu_custom_call.1} parent=1 // pred_region
      %51 = dma.done [#allocation6], 512
    $region17: #{tpu_custom_call.1} parent=1 // pred_fallthru
      _
    %s52 = sadd.s32 0, 0
    %p53 = scmp.lt.s32.totalorder %s52, 0
    %s54 = scalar_select %p53, %s52, 0
    %s55 = smul.u32 4, %s54
    %s56 = sadd.s32 0, 0
    %p57 = scmp.lt.s32.totalorder %s56, 0
    %s58 = scalar_select %p57, %s56, 0
    %s59 = smul.u32 4, %s58
    %p60 = scmp.eq.s32.totalorder 0, 0
    // Predicated region
    $region18: #{tpu_custom_call.1} parent=1 // pred_check
      %p61 = pneg %p60
    $region19: #{tpu_custom_call.1} parent=1 // pred_check_branch
      %63 = sbr.rel (%p61) target = $region21
    $region20: #{tpu_custom_call.1} parent=1 // pred_region
      %64 = vst [vmem:[#allocation7] sm:$0xff] 0.0
    $region21: #{tpu_custom_call.1} parent=1 // pred_fallthru
      _
    %v65 = vld [vmem:[#allocation2] sm:$0xff]
    %v66 = vld [vmem:[#allocation2 + $0x8] sm:$0xff]
    %v67 = vld [vmem:[#allocation2 + $0x10] sm:$0xff]
    %v68 = vld [vmem:[#allocation2 + $0x18] sm:$0xff]
    %v69 = vld [vmem:[#allocation5] sm:$0xff]
    %v70 = vld [vmem:[#allocation5 + $0x8] sm:$0xff]
    %v71 = vld [vmem:[#allocation5 + $0x10] sm:$0xff]
    %v72 = vld [vmem:[#allocation5 + $0x18] sm:$0xff]
    %v73 = vmul.f32 %v65, %v69
    %v74 = vmul.f32 %v66, %v70
    %v75 = vmul.f32 %v67, %v71
    %v76 = vmul.f32 %v68, %v72
    %77 = vadd.xlane.f32.xlu0 %v73
    %v78 = vpop.xlane.xlu0 %77
    %79 = vadd.xlane.f32.xlu0 %v74
    %v80 = vpop.xlane.xlu0 %79
    %81 = vadd.xlane.f32.xlu0 %v75
    %v82 = vpop.xlane.xlu0 %81
    %83 = vadd.xlane.f32.xlu0 %v76
    %v84 = vpop.xlane.xlu0 %83
    %v85 = vmul.f32 %v65, %v65
    %v86 = vmul.f32 %v66, %v66
    %v87 = vmul.f32 %v67, %v67
    %v88 = vmul.f32 %v68, %v68
    %89 = vadd.xlane.f32.xlu0 %v85
    %v90 = vpop.xlane.xlu0 %89
    %91 = vadd.xlane.f32.xlu0 %v86
    %v92 = vpop.xlane.xlu0 %91
    %93 = vadd.xlane.f32.xlu0 %v87
    %v94 = vpop.xlane.xlu0 %93
    %95 = vadd.xlane.f32.xlu0 %v88
    %v96 = vpop.xlane.xlu0 %95
    %v97 = vmul.f32 %v69, %v69
    %v98 = vmul.f32 %v70, %v70
    %v99 = vmul.f32 %v71, %v71
    %v100 = vmul.f32 %v72, %v72
    %101 = vadd.xlane.f32.xlu0 %v97
    %v102 = vpop.xlane.xlu0 %101
    %103 = vadd.xlane.f32.xlu0 %v98
    %v104 = vpop.xlane.xlu0 %103
    %105 = vadd.xlane.f32.xlu0 %v99
    %v106 = vpop.xlane.xlu0 %105
    %107 = vadd.xlane.f32.xlu0 %v100
    %v108 = vpop.xlane.xlu0 %107
    %v109 = vmul.f32 %v90, %v102
    %v110 = vmul.f32 %v92, %v104
    %v111 = vmul.f32 %v94, %v106
    %v112 = vmul.f32 %v96, %v108
    %v113 = vmax.f32 %v109, 1e-16
    %v114 = vmax.f32 %v110, 1e-16
    %v115 = vmax.f32 %v111, 1e-16
    %v116 = vmax.f32 %v112, 1e-16
    %v117 = vrsqrt.pop %v113
    %v118 = vrsqrt.pop %v114
    %v119 = vrsqrt.pop %v115
    %v120 = vrsqrt.pop %v116
    %v121 = vmul.f32 %v78, %v117
    %v122 = vmul.f32 %v80, %v118
    %v123 = vmul.f32 %v82, %v119
    %v124 = vmul.f32 %v84, %v120
    %s125 = sadd.s32 0, 0
    %s126 = smul.u32 %s125, 32
    %v127 = vlaneseq
    %v128 = vshrl.u32 %v127, 7
    %v129 = vadd.s32 %v128, 8
    %v130 = vadd.s32 %v128, 16
    %v131 = vadd.s32 %v128, 24
    %v132 = vstv %s126
    %v133 = vadd.s32 %v128, %v132
    %v134 = vadd.s32 %v129, %v132
    %v135 = vadd.s32 %v130, %v132
    %v136 = vadd.s32 %v131, %v132
    %vm137 = vcmp.lt.s32.totalorder %v133, 32
    %vm138 = vcmp.lt.s32.totalorder %v134, 32
    %vm139 = vcmp.lt.s32.totalorder %v135, 32
    %vm140 = vcmp.lt.s32.totalorder %v136, 32
    %v141 = vsel %vm137, %v121, 0.0
    %v142 = vsel %vm138, %v122, 0.0
    %v143 = vsel %vm139, %v123, 0.0
    %v144 = vsel %vm140, %v124, 0.0
    %v145 = vld [vmem:[#allocation7] sm:$0xff]
    %vm146 = vcmask 7168
    %v147 = vsel %vm146, %v141, 0.0
    %v148 = vsel %vm146, %v142, 0.0
    %v149 = vadd.f32 %v147, %v148
    %v150 = vsel %vm146, %v143, 0.0
    %v151 = vadd.f32 %v149, %v150
    %v152 = vsel %vm146, %v144, 0.0
    %v153 = vadd.f32 %v151, %v152
    %154 = vadd.xlane.f32.xlu0 %v153
    %v155 = vpop.xlane.xlu0 %154
    %v156 = vrot.slane %v155, 4
    %v157 = vadd.f32 %v155, %v156
    %v158 = vrot.slane %v157, 2
    %v159 = vadd.f32 %v157, %v158
    %v160 = vrot.slane %v159, 1
    %v161 = vadd.f32 %v159, %v160
    %s162 = vtos %v161
    %v163 = vstv %s162
    %v164 = vadd.f32 %v145, %v163
    %165 = vst [vmem:[#allocation7] sm:$0xff] %v164
    // Predicated region
    $region22: #{tpu_custom_call.1} parent=1 // pred_check
      _
    $region23: #{tpu_custom_call.1} parent=1 // pred_check_branch
      %167 = sbr.rel (0) target = $region25
    $region24: #{tpu_custom_call.1} parent=1 // pred_region
      %s169 = ssub.s32 128, 128
      %170 = vsyncadd [#allocation4], %s169
      %s172 = sshll.u32 [#allocation7], 4
      %s173 = int_to_ptr.vmem [resolvable:$true] %s172
      %175 = dma.vmem_to_hbm [thread:$0]  %s173, 128, %s2, [#allocation4]
    $region25: #{tpu_custom_call.1} parent=1 // pred_fallthru
      _
    // Predicated region
    $region26: #{tpu_custom_call.1} parent=1 // pred_check
      _
    $region27: #{tpu_custom_call.1} parent=1 // pred_check_branch
      %177 = sbr.rel (0) target = $region29
    $region28: #{tpu_custom_call.1} parent=1 // pred_region
      %178 = dma.done [#allocation4], 128
    $region29: #{tpu_custom_call.1} parent=1 // pred_fallthru
      _
    %179 = vsyncpa [#allocation3], 1
    %180 = vsyncpa [#allocation6], 1
    %181 = vsyncpa [#allocation4], 1

</llo_original>
